<compile_context>
chip_gen: v5e
topology: v5e:2x2
jax: 0.10.0
libtpu: 0.0.40
codegen_flags: <defaults>
</compile_context>

<pallas_src>
import functools

import numpy as np
import jax
import jax.numpy as jnp
from jax.experimental import pallas as pl
from jax.experimental.pallas import tpu as pltpu

LANE = 128
MAX_TILE_BYTES = 2 * 1024 * 1024        # per-block payload (per perf review)
FANOUT_VMEM_BUDGET = 8 * 1024 * 1024    # double-buffered (1 + world) blocks
VMEM_LIMIT_BYTES = 32 * 1024 * 1024     # within scoped limits on v5e/v6e/v7x


def _round_up(a, b):
    return (a + b - 1) // b * b


def _copy_kernel(src_ref, x_ref, o_ref):
    # Grid path: copy the source rank's row tile to one destination rank.
    # src_ref is the SMEM scalar-prefetch ref (consumed by the index_maps).
    del src_ref
    o_ref[...] = x_ref[...]


def _fanout_kernel(src_ref, x_ref, o_ref):
    # Small-payload path: write the source row tile to every rank in one step.
    del src_ref
    o_ref[...] = jnp.broadcast_to(x_ref[...], o_ref.shape)


@functools.partial(jax.jit, static_argnames=("force_grid_path",))
def pallas_broadcast(x_all, src, force_grid_path=False):
    """Emulates torch.distributed.broadcast over a rank-major stacked tensor.

    x_all: [world, ...]; returns out with out[r] = x_all[src] for every r.
    """
    world = x_all.shape[0]
    per_rank_shape = x_all.shape[1:]
    dtype = x_all.dtype
    itemsize = x_all.dtype.itemsize
    if itemsize not in (1, 2, 4):
        raise NotImplementedError(f"unsupported itemsize {itemsize}")

    if world == 1:
        return x_all  # broadcast in a single-rank group is the identity.

    # (8,128) tiling scaled for packed dtypes: 8 rows f32, 16 bf16, 32 int8.
    sublane_mult = 8 * (4 // itemsize)
    max_tile_rows = max(MAX_TILE_BYTES // (LANE * itemsize), sublane_mult)
    max_tile_rows = max_tile_rows // sublane_mult * sublane_mult

    n_elems = int(np.prod(per_rank_shape))
    rows_raw = max(-(-n_elems // LANE), 1)

    # Tile-row selection with minimal pad waste: fewest tiles respecting
    # MAX_TILE_BYTES, each rounded up to the dtype's sublane multiple.
    rows_aligned = _round_up(rows_raw, sublane_mult)
    if rows_aligned <= max_tile_rows:
        tile_rows = rows_aligned
        row_tiles = 1
    else:
        row_tiles = -(-rows_aligned // max_tile_rows)
        tile_rows = _round_up(-(-rows_aligned // row_tiles), sublane_mult)
    rows = tile_rows * row_tiles
    padded_elems = rows * LANE

    flat = x_all.reshape(world, n_elems)
    if padded_elems != n_elems:
        flat = jnp.pad(flat, ((0, 0), (0, padded_elems - n_elems)))
    tiled = flat.reshape(world, rows, LANE)  # lane-dense, native dtype

    # Clamp src so a bad value can't produce an out-of-bounds block index.
    src_arr = jnp.clip(jnp.asarray(src, dtype=jnp.int32), 0, world - 1)
    src_arr = src_arr.reshape(1)

    tile_bytes = tile_rows * LANE * itemsize
    payload_bytes = rows * LANE * itemsize
    use_fanout = (not force_grid_path) and (
        2 * (1 + world) * tile_bytes <= FANOUT_VMEM_BUDGET)

    if use_fanout:
        # One grid step per row tile: a single large strided writeback covering
        # all ranks, removing (world-1) x per-step overhead for small payloads.
        out = pl.pallas_call(
            _fanout_kernel,
            out_shape=jax.ShapeDtypeStruct((world, rows, LANE), dtype),
            grid_spec=pltpu.PrefetchScalarGridSpec(
                num_scalar_prefetch=1,
                grid=(row_tiles,),
                in_specs=[pl.BlockSpec((1, tile_rows, LANE),
                                       lambda j, s: (s[0], j, 0))],
                out_specs=pl.BlockSpec((world, tile_rows, LANE),
                                       lambda j, s: (0, j, 0)),
            ),
            input_output_aliases={1: 0},
            compiler_params=pltpu.CompilerParams(
                dimension_semantics=("parallel",),
                vmem_limit_bytes=VMEM_LIMIT_BYTES),
            cost_estimate=pl.CostEstimate(
                flops=0, transcendentals=0,
                bytes_accessed=(1 + world) * payload_bytes),
        )(src_arr, tiled)
    else:
        # 2-D grid, destination-rank axis innermost: the source row tile is
        # fetched from HBM once per row tile and reused for every writeback.
        # The src rank itself is skipped (its slice is already correct in
        # place via input_output_aliases), so writes are (world-1) x payload.
        out = pl.pallas_call(
            _copy_kernel,
            out_shape=jax.ShapeDtypeStruct((world, rows, LANE), dtype),
            grid_spec=pltpu.PrefetchScalarGridSpec(
                num_scalar_prefetch=1,
                grid=(row_tiles, world - 1),
                in_specs=[pl.BlockSpec(
                    (1, tile_rows, LANE),
                    lambda j, i, s: (s[0], j, 0))],
                out_specs=pl.BlockSpec(
                    (1, tile_rows, LANE),
                    # Remap inner index past the source rank: i -> i + (i>=src)
                    lambda j, i, s: (jnp.where(i >= s[0], i + 1, i), j, 0)),
            ),
            input_output_aliases={1: 0},
            compiler_params=pltpu.CompilerParams(
                dimension_semantics=("parallel", "parallel"),
                vmem_limit_bytes=VMEM_LIMIT_BYTES),
            cost_estimate=pl.CostEstimate(
                flops=0, transcendentals=0,
                bytes_accessed=world * payload_bytes),
        )(src_arr, tiled)

    flat_out = out.reshape(world, padded_elems)
    if padded_elems != n_elems:
        flat_out = flat_out[:, :n_elems]
    return flat_out.reshape(x_all.shape)


if __name__ == "__main__":
    key = jax.random.PRNGKey(0)
    world_size = 4
    src = 2

    # float32 payload: each "rank" holds x of shape [C=4, H=16, W=16].
    x_all = jax.random.normal(key, (world_size, 4, 16, 16), dtype=jnp.float32)
    expected = jnp.broadcast_to(x_all[src], x_all.shape)

    # Small-payload fan-out path.
    out = jax.block_until_ready(pallas_broadcast(x_all, src))
    assert out.shape == x_all.shape and out.dtype == x_all.dtype
    assert bool(jnp.array_equal(out, expected))

    # 2-D grid path with the src-rank skip (forced for coverage); also check
    # the boundary source ranks to exercise the index remap.
    out_g = jax.block_until_ready(pallas_broadcast(x_all, src,
                                                   force_grid_path=True))
    assert bool(jnp.array_equal(out_g, expected))
    for s in (0, world_size - 1):
        exp_s = jnp.broadcast_to(x_all[s], x_all.shape)
        out_s = jax.block_until_ready(pallas_broadcast(x_all, s,
                                                       force_grid_path=True))
        assert bool(jnp.array_equal(out_s, exp_s))

    # bfloat16 payload exercises the packed-dtype (16,128) tiling + pad path.
    x_bf16 = x_all.astype(jnp.bfloat16)
    expected_b = jnp.broadcast_to(x_bf16[src], x_bf16.shape)
    out_b = jax.block_until_ready(pallas_broadcast(x_bf16, src))
    assert out_b.shape == x_bf16.shape and out_b.dtype == x_bf16.dtype
    assert bool(jnp.array_equal(out_b.astype(jnp.float32),
                                expected_b.astype(jnp.float32)))

    print("KERNEL_OK")
</pallas_src>

<mosaic_0001>
module attributes {stable_mosaic.version = 11 : i64} {
  func.func @_fanout_kernel(%arg0: i32, %arg1: memref<1xi32, #tpu.memory_space<smem>>, %arg2: memref<1x8x128xf32, #tpu.memory_space<vmem>>, %arg3: memref<4x8x128xf32, #tpu.memory_space<vmem>>) attributes {dimension_semantics = [#tpu.dimension_semantics<parallel>], iteration_bounds = array<i64: 1>, scalar_prefetch = 1 : i64, scratch_operands = 0 : i64, tpu.core_type = #tpu.core_type<tc>, window_params = [{transform_indices = @transform_0, window_bounds = array<i64: 1, 8, 128>}, {transform_indices = @transform_1, window_bounds = array<i64: 4, 8, 128>}]} {
    %c0 = arith.constant 0 : index
    %c0_0 = arith.constant 0 : index
    %c0_1 = arith.constant 0 : index
    %0 = vector.load %arg2[%c0, %c0_0, %c0_1] : memref<1x8x128xf32, #tpu.memory_space<vmem>>, vector<1x8x128xf32>
    %1 = vector.shape_cast %0 : vector<1x8x128xf32> to vector<1x8x128xf32>
    %2 = vector.broadcast %1 : vector<1x8x128xf32> to vector<4x8x128xf32>
    %c0_2 = arith.constant 0 : index
    %c0_3 = arith.constant 0 : index
    %c0_4 = arith.constant 0 : index
    %3 = vector.load %arg3[%c0_2, %c0_3, %c0_4] : memref<4x8x128xf32, #tpu.memory_space<vmem>>, vector<4x8x128xf32>
    tpu.vector_store %arg3[%c0_2, %c0_3, %c0_4], %2 {strides = array<i32>} : memref<4x8x128xf32, #tpu.memory_space<vmem>>, vector<4x8x128xf32>,
    return
  }
  func.func @transform_0(%arg0: i32, %arg1: memref<1xi32, #tpu.memory_space<smem>>) -> (i32, i32, i32) {
    %c0 = arith.constant 0 : index
    %0 = memref.load %arg1[%c0] : memref<1xi32, #tpu.memory_space<smem>>
    %c0_i32 = arith.constant 0 : i32
    %c0_i32_0 = arith.constant 0 : i32
    return %0, %arg0, %c0_i32 : i32, i32, i32
  }
  func.func @transform_1(%arg0: i32, %arg1: memref<1xi32, #tpu.memory_space<smem>>) -> (i32, i32, i32) {
    %c0_i32 = arith.constant 0 : i32
    %c0_i32_0 = arith.constant 0 : i32
    %c0_i32_1 = arith.constant 0 : i32
    return %c0_i32, %arg0, %c0_i32_0 : i32, i32, i32
  }
}

</mosaic_0001>

<llo_original>
// kernel: pallas_broadcast.1
$region0: #{pallas_broadcast.1}
  #allocation0 [shape = 'u32[]', space=smem, size = 0x4, offset = 0x4, fixed_abs, tag = 'smem constant byte address 0x4 - core index']
  #allocation1 [shape = 'u32[72,128]{1,0:T(1,128)}', space=vmem, size = 0x9000, scoped, tag = 'internal scratch']
  #allocation2 [shape = 's32[1]{0}', space=sflag, size = 0x4, scoped, tag = 'scoped memory for pallas_broadcast.1']
  #allocation3 [shape = 's32[1]{0:T(128)S(6)}', space=smem, size = 0x200, scoped, tag = 'prefetched SMEM operand 0']
  %s0 = inlined_call_operand.<no memory space> [shape: s32[1], index: 0, kind: input, shape index: {}]
  %s1 = inlined_call_operand.vmem [shape: f32[4,8,128], index: 1, kind: input, shape index: {}, may-alias: {1,2}]
  %s2 = inlined_call_operand.vmem [shape: f32[4,8,128], index: 2, kind: output, shape index: {}, may-alias: {1,2}]
  %s3 = sld [smem:[#allocation0]]
  $region14: #{pallas_broadcast.1} parent=0
    _
  %s5 = ssub.s32 1, %s3
  %s6 = scalar_select 0, %s5, %s3
  %7 = sst [smem:[#allocation3]] %s0
  // Predicated region
  $region2: #{pallas_broadcast.1} parent=0 // pred_check
    _
  $region3: #{pallas_broadcast.1} parent=0 // pred_check_branch
    %9 = sbr.rel (0) target = $region5
  $region4: #{pallas_broadcast.1} parent=0 // pred_region
    %s10 = sld [smem:[#allocation3]]
    %p11 = scmp.lt.s32.totalorder %s10, 3
    %s12 = scalar_select %p11, %s10, 3
    %s13 = smul.addr %s12, 8
    %s14 = scalar_lea.vmem %s1, %s13
    %s15 = sld [smem:[#allocation3]]
  $region5: #{pallas_broadcast.1} parent=0 // pred_fallthru
    _
  %s16 = sld [smem:[#allocation3]]
  %p17 = scmp.lt.s32.totalorder %s16, 3
  %s18 = scalar_select %p17, %s16, 3
  %s19 = smul.addr %s18, 8
  %s20 = scalar_lea.vmem %s1, %s19
  %s21 = sld [smem:[#allocation3]]
  %p22 = scmp.lt.s32.totalorder %s21, 3
  %s23 = scalar_select %p22, %s21, 3
  %s24 = smul.addr %s23, 8
  %s25 = scalar_lea.vmem %s1, %s24
  %s26 = sld [smem:[#allocation3]]
  %v27 = vld [vmem:[%s25] sm:$0xff]
  %28 = vst [vmem:[%s2] sm:$0xff] %v27
  %29 = vst [vmem:[%s2 + $0x8] sm:$0xff] %v27
  %30 = vst [vmem:[%s2 + $0x10] sm:$0xff] %v27
  %31 = vst [vmem:[%s2 + $0x18] sm:$0xff] %v27
  // Predicated region
  $region6: #{pallas_broadcast.1} parent=0 // pred_check
    _
  $region7: #{pallas_broadcast.1} parent=0 // pred_check_branch
    %33 = sbr.rel (0) target = $region9
  $region8: #{pallas_broadcast.1} parent=0 // pred_region
    _
  $region9: #{pallas_broadcast.1} parent=0 // pred_fallthru
    _
  // Predicated region
  $region10: #{pallas_broadcast.1} parent=0 // pred_check
    _
  $region11: #{pallas_broadcast.1} parent=0 // pred_check_branch
    %35 = sbr.rel (0) target = $region13
  $region12: #{pallas_broadcast.1} parent=0 // pred_region
    _
  $region13: #{pallas_broadcast.1} parent=0 // pred_fallthru
    _

</llo_original>
